<compile_context>
chip_gen: v6e
topology: v6e:2x2x1
jax: 0.10.0
libtpu: 0.0.40
codegen_flags: <defaults>
</compile_context>

<pallas_src>
import jax
import jax.numpy as jnp
from jax.experimental import pallas as pl
from jax.experimental.pallas import tpu as pltpu

# ----------------------------- config ---------------------------------------
BATCH = 1
SEQ = 4
EMB = 6
FFN_HID = 12

MAX_ROW_TILE = 32768   # lane columns (tokens) per grid step; multiple of 128
MIN_GRID_STEPS = 8     # keep >= 8 parallel steps so both v7x TCs stay busy


def _row_tile(rows: int) -> int:
    """Pick the token (lane) tile width for a (E, rows) slab."""
    if rows <= 128:
        # Single full-extent block: last block dim == full array dim satisfies
        # the (8,128) BlockSpec rule even for tiny row counts (e.g. 4).
        return rows
    # Lane-aligned tile: multiple of 128, capped, and small enough to keep at
    # least MIN_GRID_STEPS grid steps when the token count is large.
    tile = max(128, (rows // MIN_GRID_STEPS) // 128 * 128)
    return min(MAX_ROW_TILE, tile)


# ----------------------------- kernel ---------------------------------------
def ffn_kernel(x_ref, w1_ref, w2_ref, b1_ref, b2_ref, o_ref):
    # x_ref : (E, TILE)   tokens on the lane axis
    # w1_ref: (H, E)      fc1.weight  (PyTorch (out, in) layout)
    # w2_ref: (E, H)      fc2.weight
    # b1_ref: (H, 1)      fc1.bias    (broadcast over lanes)
    # b2_ref: (E, 1)      fc2.bias
    # o_ref : (E, TILE)
    f32 = jnp.float32

    h = jnp.dot(w1_ref[...], x_ref[...], preferred_element_type=f32)   # (H, TILE)
    h = jnp.maximum(h + b1_ref[...], 0.0)
    y = jnp.dot(w2_ref[...], h, preferred_element_type=f32) + b2_ref[...]  # (E, TILE)
    o_ref[...] = y.astype(o_ref.dtype)


# ----------------------------- wrapper ---------------------------------------
@jax.jit
def ffn_pallas(x, w1, b1, w2, b2):
    B, S, E = x.shape
    H = w1.shape[0]
    rows = B * S

    # Fold batch*seq into the token axis and put it on lanes (last dim).
    x_t = x.reshape(rows, E).T                     # (E, rows)
    b1c = b1.reshape(H, 1)                         # broadcast columns
    b2c = b2.reshape(E, 1)

    tile = _row_tile(rows)
    grid = (pl.cdiv(rows, tile),)                  # ragged last block is edge-masked

    out_t = pl.pallas_call(
        ffn_kernel,
        out_shape=jax.ShapeDtypeStruct((E, rows), jnp.float32),
        grid_spec=pltpu.PrefetchScalarGridSpec(
            num_scalar_prefetch=0,
            grid=grid,
            in_specs=[
                pl.BlockSpec((E, tile), lambda r: (0, r)),   # activations (lane-dense)
                pl.BlockSpec((H, E), lambda r: (0, 0)),      # fc1.weight (resident)
                pl.BlockSpec((E, H), lambda r: (0, 0)),      # fc2.weight (resident)
                pl.BlockSpec((H, 1), lambda r: (0, 0)),      # fc1.bias
                pl.BlockSpec((E, 1), lambda r: (0, 0)),      # fc2.bias
            ],
            out_specs=pl.BlockSpec((E, tile), lambda r: (0, r)),
        ),
        compiler_params=pltpu.CompilerParams(
            dimension_semantics=("parallel",)),
    )(x_t, w1, w2, b1c, b2c)

    return out_t.T.reshape(B, S, E)


# ----------------------------- reference (pure JAX) ---------------------------
def ffn_ref(x, w1, b1, w2, b2):
    h = jnp.maximum(x @ w1.T + b1, 0.0)
    return h @ w2.T + b2


# ----------------------------- main -------------------------------------------
if __name__ == "__main__":
    key = jax.random.PRNGKey(0)
    ks = jax.random.split(key, 6)

    x = jax.random.uniform(ks[0], (BATCH, SEQ, EMB), dtype=jnp.float32)

    def linit(k, shape, fan_in):
        bound = 1.0 / jnp.sqrt(jnp.float32(fan_in))
        return jax.random.uniform(k, shape, jnp.float32, -bound, bound)

    # PyTorch nn.Linear default init: U(-1/sqrt(fan_in), 1/sqrt(fan_in))
    w1 = linit(ks[1], (FFN_HID, EMB), EMB)
    b1 = linit(ks[2], (FFN_HID,), EMB)
    w2 = linit(ks[3], (EMB, FFN_HID), FFN_HID)
    b2 = linit(ks[4], (EMB,), FFN_HID)

    out = ffn_pallas(x, w1, b1, w2, b2)
    out = jax.block_until_ready(out)

    ref = ffn_ref(x, w1, b1, w2, b2)
    assert out.shape == (BATCH, SEQ, EMB)
    assert jnp.allclose(out, ref, atol=1e-5, rtol=1e-5), (
        f"max abs err {jnp.max(jnp.abs(out - ref))}")

    print("KERNEL_OK")
</pallas_src>

<mosaic_0001>
module attributes {stable_mosaic.version = 11 : i64} {
  func.func @ffn_kernel(%arg0: i32, %arg1: memref<6x4xf32, #tpu.memory_space<vmem>>, %arg2: memref<12x6xf32, #tpu.memory_space<vmem>>, %arg3: memref<6x12xf32, #tpu.memory_space<vmem>>, %arg4: memref<12x1xf32, #tpu.memory_space<vmem>>, %arg5: memref<6x1xf32, #tpu.memory_space<vmem>>, %arg6: memref<6x4xf32, #tpu.memory_space<vmem>>) attributes {dimension_semantics = [#tpu.dimension_semantics<parallel>], iteration_bounds = array<i64: 1>, scalar_prefetch = 0 : i64, scratch_operands = 0 : i64, tpu.core_type = #tpu.core_type<tc>, window_params = [{transform_indices = @transform_0, window_bounds = array<i64: 6, 4>}, {pipeline_mode = #tpu.pipeline_mode<synchronous>, transform_indices = @transform_1, window_bounds = array<i64: 12, 6>}, {pipeline_mode = #tpu.pipeline_mode<synchronous>, transform_indices = @transform_2, window_bounds = array<i64: 6, 12>}, {pipeline_mode = #tpu.pipeline_mode<synchronous>, transform_indices = @transform_3, window_bounds = array<i64: 12, 1>}, {pipeline_mode = #tpu.pipeline_mode<synchronous>, transform_indices = @transform_4, window_bounds = array<i64: 6, 1>}, {transform_indices = @transform_5, window_bounds = array<i64: 6, 4>}]} {
    %c0 = arith.constant 0 : index
    %c0_0 = arith.constant 0 : index
    %0 = vector.load %arg2[%c0, %c0_0] : memref<12x6xf32, #tpu.memory_space<vmem>>, vector<12x6xf32>
    %c0_1 = arith.constant 0 : index
    %c0_2 = arith.constant 0 : index
    %1 = vector.load %arg1[%c0_1, %c0_2] : memref<6x4xf32, #tpu.memory_space<vmem>>, vector<6x4xf32>
    %cst = arith.constant dense<0.000000e+00> : vector<12x4xf32>
    %2 = tpu.matmul %0, %1, %cst {dimension_numbers = #tpu.dot_dimension_numbers<[1], [0], [0], [1], [0, 0, 1, 1], [], []>} : vector<12x6xf32>, vector<6x4xf32>, vector<12x4xf32> -> vector<12x4xf32>
    %c0_3 = arith.constant 0 : index
    %c0_4 = arith.constant 0 : index
    %3 = vector.load %arg4[%c0_3, %c0_4] : memref<12x1xf32, #tpu.memory_space<vmem>>, vector<12x1xf32>
    %4 = vector.broadcast %3 : vector<12x1xf32> to vector<12x4xf32>
    %5 = arith.addf %2, %4 : vector<12x4xf32>
    %cst_5 = arith.constant 0.000000e+00 : f32
    %6 = vector.broadcast %cst_5 : f32 to vector<12x4xf32>
    %7 = arith.maximumf %5, %6 : vector<12x4xf32>
    %c0_6 = arith.constant 0 : index
    %c0_7 = arith.constant 0 : index
    %8 = vector.load %arg3[%c0_6, %c0_7] : memref<6x12xf32, #tpu.memory_space<vmem>>, vector<6x12xf32>
    %cst_8 = arith.constant dense<0.000000e+00> : vector<6x4xf32>
    %9 = tpu.matmul %8, %7, %cst_8 {dimension_numbers = #tpu.dot_dimension_numbers<[1], [0], [0], [1], [0, 0, 1, 1], [], []>} : vector<6x12xf32>, vector<12x4xf32>, vector<6x4xf32> -> vector<6x4xf32>
    %c0_9 = arith.constant 0 : index
    %c0_10 = arith.constant 0 : index
    %10 = vector.load %arg5[%c0_9, %c0_10] : memref<6x1xf32, #tpu.memory_space<vmem>>, vector<6x1xf32>
    %11 = vector.broadcast %10 : vector<6x1xf32> to vector<6x4xf32>
    %12 = arith.addf %9, %11 : vector<6x4xf32>
    %c0_11 = arith.constant 0 : index
    %c0_12 = arith.constant 0 : index
    %13 = vector.load %arg6[%c0_11, %c0_12] : memref<6x4xf32, #tpu.memory_space<vmem>>, vector<6x4xf32>
    tpu.vector_store %arg6[%c0_11, %c0_12], %12 {strides = array<i32>} : memref<6x4xf32, #tpu.memory_space<vmem>>, vector<6x4xf32>,
    return
  }
  func.func @transform_0(%arg0: i32) -> (i32, i32) {
    %c0_i32 = arith.constant 0 : i32
    %c0_i32_0 = arith.constant 0 : i32
    return %c0_i32, %arg0 : i32, i32
  }
  func.func @transform_1(%arg0: i32) -> (i32, i32) {
    %c0_i32 = arith.constant 0 : i32
    %c0_i32_0 = arith.constant 0 : i32
    %c0_i32_1 = arith.constant 0 : i32
    return %c0_i32, %c0_i32_0 : i32, i32
  }
  func.func @transform_2(%arg0: i32) -> (i32, i32) {
    %c0_i32 = arith.constant 0 : i32
    %c0_i32_0 = arith.constant 0 : i32
    %c0_i32_1 = arith.constant 0 : i32
    return %c0_i32, %c0_i32_0 : i32, i32
  }
  func.func @transform_3(%arg0: i32) -> (i32, i32) {
    %c0_i32 = arith.constant 0 : i32
    %c0_i32_0 = arith.constant 0 : i32
    %c0_i32_1 = arith.constant 0 : i32
    return %c0_i32, %c0_i32_0 : i32, i32
  }
  func.func @transform_4(%arg0: i32) -> (i32, i32) {
    %c0_i32 = arith.constant 0 : i32
    %c0_i32_0 = arith.constant 0 : i32
    %c0_i32_1 = arith.constant 0 : i32
    return %c0_i32, %c0_i32_0 : i32, i32
  }
  func.func @transform_5(%arg0: i32) -> (i32, i32) {
    %c0_i32 = arith.constant 0 : i32
    %c0_i32_0 = arith.constant 0 : i32
    return %c0_i32, %arg0 : i32, i32
  }
}

</mosaic_0001>

<llo_original>
// kernel: ffn_pallas.1
$region0: #{ffn_pallas.1}
  #allocation0 [shape = 'u32[]', space=smem, size = 0x4, offset = 0x4, fixed_abs, tag = 'smem constant byte address 0x4 - core index']
  #allocation1 [shape = 'u32[144,128]{1,0:T(1,128)}', space=vmem, size = 0x12000, scoped, tag = 'internal scratch']
  %s0 = inlined_call_operand.vmem [shape: f32[6,4], index: 0, kind: input, shape index: {}]
  %s1 = inlined_call_operand.vmem [shape: f32[12,6], index: 1, kind: input, shape index: {}]
  %s2 = inlined_call_operand.vmem [shape: f32[6,12], index: 2, kind: input, shape index: {}]
  %s3 = inlined_call_operand.vmem [shape: f32[12,1], index: 3, kind: input, shape index: {}]
  %s4 = inlined_call_operand.vmem [shape: f32[6,1], index: 4, kind: input, shape index: {}]
  %s5 = inlined_call_operand.vmem [shape: f32[6,4], index: 5, kind: output, shape index: {}]
  %s6 = sld [smem:[#allocation0]]
  $region30: #{ffn_pallas.1} parent=0
    _
  %s8 = ssub.s32 1, %s6
  %s9 = scalar_select 0, %s8, %s6
  // Predicated region
  $region2: #{ffn_pallas.1} parent=0 // pred_check
    _
  $region3: #{ffn_pallas.1} parent=0 // pred_check_branch
    %11 = sbr.rel (0) target = $region5
  $region4: #{ffn_pallas.1} parent=0 // pred_region
    _
  $region5: #{ffn_pallas.1} parent=0 // pred_fallthru
    _
  // Predicated region
  $region6: #{ffn_pallas.1} parent=0 // pred_check
    _
  $region7: #{ffn_pallas.1} parent=0 // pred_check_branch
    %13 = sbr.rel (0) target = $region9
  $region8: #{ffn_pallas.1} parent=0 // pred_region
    _
  $region9: #{ffn_pallas.1} parent=0 // pred_fallthru
    _
  // Predicated region
  $region10: #{ffn_pallas.1} parent=0 // pred_check
    _
  $region11: #{ffn_pallas.1} parent=0 // pred_check_branch
    %15 = sbr.rel (0) target = $region13
  $region12: #{ffn_pallas.1} parent=0 // pred_region
    _
  $region13: #{ffn_pallas.1} parent=0 // pred_fallthru
    _
  // Predicated region
  $region14: #{ffn_pallas.1} parent=0 // pred_check
    _
  $region15: #{ffn_pallas.1} parent=0 // pred_check_branch
    %17 = sbr.rel (0) target = $region17
  $region16: #{ffn_pallas.1} parent=0 // pred_region
    _
  $region17: #{ffn_pallas.1} parent=0 // pred_fallthru
    _
  // Predicated region
  $region18: #{ffn_pallas.1} parent=0 // pred_check
    _
  $region19: #{ffn_pallas.1} parent=0 // pred_check_branch
    %19 = sbr.rel (0) target = $region21
  $region20: #{ffn_pallas.1} parent=0 // pred_region
    _
  $region21: #{ffn_pallas.1} parent=0 // pred_fallthru
    _
  %v20 = vld [vmem:[%s1] sm:$0xff]
  %v21 = vld [vmem:[%s1 + $0x8] sm:$0xf]
  %v22 = vld [vmem:[%s0] sm:$0x3f]
  %v23 = vld [vmem:[%s3] sm:$0xff]
  %v24 = vld [vmem:[%s3 + $0x8] sm:$0xf]
  %26 = vset.pattern.permute.xlu0 0
  %27 = vperm.xlu0 %26, %v23
  %v28 = vpop.permute.xlu0 %27
  %31 = vset.pattern.permute.xlu0 0
  %32 = vperm.xlu0 %31, %v24
  %v33 = vpop.permute.xlu0 %32
  %vm35 = vcmask 48128
  %v37 = vsel %vm35, %v20, 0
  %v40 = vsel %vm35, %v21, 0
  %vm42 = vcmask 1045504
  %v44 = vsel %vm42, %v22, 0
  %46 = vmatprep.subr.mxu0 0.0
  %47 = vmatpush1.msra.mxu0 0.0
  %48 = vmatprep.subr.mxu0 0.0
  %49 = vmatpush1.msra.mxu0 0.0
  %50 = vmatprep.subr.mxu0 0.0
  %51 = vmatpush1.msra.mxu0 0.0
  %52 = vmatprep.subr.mxu0 0.0
  %53 = vmatpush1.msra.mxu0 0.0
  %54 = vmatprep.subr.mxu0 0.0
  %55 = vmatpush1.msra.mxu0 0.0
  %56 = vmatprep.subr.mxu0 0.0
  %57 = vmatpush1.msra.mxu0 0.0
  %58 = vmatprep.subr.mxu0 0.0
  %59 = vmatpush1.msra.mxu0 0.0
  %60 = vmatprep.subr.mxu0 0.0
  %61 = vmatpush1.msra.mxu0 0.0
  %62 = vmatprep.subr.mxu0 0.0
  %63 = vmatpush1.msra.mxu0 0.0
  %64 = vmatprep.subr.mxu0 0.0
  %65 = vmatpush1.msra.mxu0 0.0
  %66 = vmatprep.subr.mxu0 0.0
  %67 = vmatpush1.msra.mxu0 0.0
  %68 = vmatprep.subr.mxu0 0.0
  %69 = vmatpush1.msra.mxu0 0.0
  %70 = vmatprep.subr.mxu0 0.0
  %71 = vmatpush1.msra.mxu0 0.0
  %72 = vmatprep.subr.mxu0 0.0
  %73 = vmatpush1.msra.mxu0 0.0
  %74 = vmatprep.subr.mxu0 0.0
  %75 = vmatpush1.msra.mxu0 0.0
  %76 = vmatprep.subr.mxu0 0.0
  %77 = vmatpush1.msra.mxu0 %v44
  %78 = vmatprep.subr.mxu0 0.0
  %79 = vmatpush2.msra.mxu0 0.0
  %80 = vmatprep.subr.mxu0 0.0
  %81 = vmatpush2.msra.mxu0 0.0
  %82 = vmatprep.subr.mxu0 0.0
  %83 = vmatpush2.msra.mxu0 0.0
  %84 = vmatprep.subr.mxu0 0.0
  %85 = vmatpush2.msra.mxu0 0.0
  %86 = vmatprep.subr.mxu0 0.0
  %87 = vmatpush2.msra.mxu0 0.0
  %88 = vmatprep.subr.mxu0 0.0
  %89 = vmatpush2.msra.mxu0 0.0
  %90 = vmatprep.subr.mxu0 0.0
  %91 = vmatpush2.msra.mxu0 0.0
  %92 = vmatprep.subr.mxu0 0.0
  %93 = vmatpush2.msra.mxu0 0.0
  %94 = vmatprep.subr.mxu0 0.0
  %95 = vmatpush2.msra.mxu0 0.0
  %96 = vmatprep.subr.mxu0 0.0
  %97 = vmatpush2.msra.mxu0 0.0
  %98 = vmatprep.subr.mxu0 0.0
  %99 = vmatpush2.msra.mxu0 0.0
  %100 = vmatprep.subr.mxu0 0.0
  %101 = vmatpush2.msra.mxu0 0.0
  %102 = vmatprep.subr.mxu0 0.0
  %103 = vmatpush2.msra.mxu0 0.0
  %104 = vmatprep.subr.mxu0 0.0
  %105 = vmatpush2.msra.mxu0 0.0
  %106 = vmatprep.subr.mxu0 0.0
  %107 = vmatpush2.msra.mxu0 0.0
  %108 = vmatprep.subr.mxu0 0.0
  %109 = vmatpush2.msra.mxu0 0.0
  %110 = vmatprep.mubr.f32.mxu0 0.0
  %111 = vmatmul.mubr.f32.gmra.mxu0 %v37
  %v112 = vpop.f32.mrf.mxu0
  %v113 = vadd.f32 %v28, %v112
  %v114 = vpop.f32.mrf.mxu0
  %115 = vmatprep.mubr.f32.mxu0 0.0
  %116 = vmatmul.mubr.f32.gmra.mxu0 %v40
  %v117 = vpop.f32.mrf.mxu0
  %v118 = vadd.f32 %v33, %v117
  %v119 = vpop.f32.mrf.mxu0
  %120 = vdwg.mxu0
  %v121 = vmax.f32 %v113, 0.0
  %v122 = vmax.f32 %v118, 0.0
  %v123 = vld [vmem:[%s2] sm:$0x3f]
  %v124 = vld [vmem:[%s4] sm:$0x3f]
  %126 = vset.pattern.permute.xlu0 0
  %127 = vperm.xlu0 %126, %v124
  %v128 = vpop.permute.xlu0 %127
  %vm130 = vcmask 97280
  %v132 = vsel %vm130, %v123, 0
  %vm134 = vcmask 1043456
  %v136 = vsel %vm134, %v122, 0
  %138 = vmatprep.subr.mxu0 0.0
  %139 = vmatpush1.msra.mxu0 0.0
  %140 = vmatprep.subr.mxu0 0.0
  %141 = vmatpush1.msra.mxu0 0.0
  %142 = vmatprep.subr.mxu0 0.0
  %143 = vmatpush1.msra.mxu0 0.0
  %144 = vmatprep.subr.mxu0 0.0
  %145 = vmatpush1.msra.mxu0 0.0
  %146 = vmatprep.subr.mxu0 0.0
  %147 = vmatpush1.msra.mxu0 0.0
  %148 = vmatprep.subr.mxu0 0.0
  %149 = vmatpush1.msra.mxu0 0.0
  %150 = vmatprep.subr.mxu0 0.0
  %151 = vmatpush1.msra.mxu0 0.0
  %152 = vmatprep.subr.mxu0 0.0
  %153 = vmatpush1.msra.mxu0 0.0
  %154 = vmatprep.subr.mxu0 0.0
  %155 = vmatpush1.msra.mxu0 0.0
  %156 = vmatprep.subr.mxu0 0.0
  %157 = vmatpush1.msra.mxu0 0.0
  %158 = vmatprep.subr.mxu0 0.0
  %159 = vmatpush1.msra.mxu0 0.0
  %160 = vmatprep.subr.mxu0 0.0
  %161 = vmatpush1.msra.mxu0 0.0
  %162 = vmatprep.subr.mxu0 0.0
  %163 = vmatpush1.msra.mxu0 0.0
  %164 = vmatprep.subr.mxu0 0.0
  %165 = vmatpush1.msra.mxu0 0.0
  %166 = vmatprep.subr.mxu0 0.0
  %167 = vmatpush1.msra.mxu0 %v136
  %168 = vmatprep.subr.mxu0 0.0
  %169 = vmatpush1.msra.mxu0 %v121
  %170 = vmatprep.subr.mxu0 0.0
  %171 = vmatpush2.msra.mxu0 0.0
  %172 = vmatprep.subr.mxu0 0.0
  %173 = vmatpush2.msra.mxu0 0.0
  %174 = vmatprep.subr.mxu0 0.0
  %175 = vmatpush2.msra.mxu0 0.0
  %176 = vmatprep.subr.mxu0 0.0
  %177 = vmatpush2.msra.mxu0 0.0
  %178 = vmatprep.subr.mxu0 0.0
  %179 = vmatpush2.msra.mxu0 0.0
  %180 = vmatprep.subr.mxu0 0.0
  %181 = vmatpush2.msra.mxu0 0.0
  %182 = vmatprep.subr.mxu0 0.0
  %183 = vmatpush2.msra.mxu0 0.0
  %184 = vmatprep.subr.mxu0 0.0
  %185 = vmatpush2.msra.mxu0 0.0
  %186 = vmatprep.subr.mxu0 0.0
  %187 = vmatpush2.msra.mxu0 0.0
  %188 = vmatprep.subr.mxu0 0.0
  %189 = vmatpush2.msra.mxu0 0.0
  %190 = vmatprep.subr.mxu0 0.0
  %191 = vmatpush2.msra.mxu0 0.0
  %192 = vmatprep.subr.mxu0 0.0
  %193 = vmatpush2.msra.mxu0 0.0
  %194 = vmatprep.subr.mxu0 0.0
  %195 = vmatpush2.msra.mxu0 0.0
  %196 = vmatprep.subr.mxu0 0.0
  %197 = vmatpush2.msra.mxu0 0.0
  %198 = vmatprep.subr.mxu0 0.0
  %199 = vmatpush2.msra.mxu0 0.0
  %200 = vmatprep.subr.mxu0 0.0
  %201 = vmatpush2.msra.mxu0 0.0
  %202 = vmatprep.mubr.f32.mxu0 0.0
  %203 = vmatmul.mubr.f32.gmra.mxu0 %v132
  %v204 = vpop.f32.mrf.mxu0
  %v205 = vadd.f32 %v128, %v204
  %v206 = vpop.f32.mrf.mxu0
  %207 = vdwg.mxu0
  %vm208 = vcmask 29696
  %209 = vst.msk [vmem:[%s5] sm:$0x3f] %vm208, %v205
  // Predicated region
  $region22: #{ffn_pallas.1} parent=0 // pred_check
    _
  $region23: #{ffn_pallas.1} parent=0 // pred_check_branch
    %211 = sbr.rel (0) target = $region25
  $region24: #{ffn_pallas.1} parent=0 // pred_region
    _
  $region25: #{ffn_pallas.1} parent=0 // pred_fallthru
    _
  // Predicated region
  $region26: #{ffn_pallas.1} parent=0 // pred_check
    _
  $region27: #{ffn_pallas.1} parent=0 // pred_check_branch
    %213 = sbr.rel (0) target = $region29
  $region28: #{ffn_pallas.1} parent=0 // pred_region
    _
  $region29: #{ffn_pallas.1} parent=0 // pred_fallthru
    _

</llo_original>
